<compile_context>
chip_gen: v7x
topology: tpu7x:2x2x1
jax: 0.10.0
libtpu: 0.0.40
codegen_flags: <defaults>
</compile_context>

<pallas_src>
import functools

import numpy as np

import jax
import jax.numpy as jnp
from jax.experimental import pallas as pl
from jax.experimental.pallas import tpu as pltpu


def _conv_kernel(pos_ref, x_ref, w_ref, b_ref, o_ref, p_ref, *,
                 n, c_in, c_out, h, w, kh_size, kw_size, pad, hw):
    """Fused ReflectionPad2d + Conv2d + bias for the whole batch (stride 1).

    pos_ref: (2, HW) int32          row 0 = output-row index per lane, row 1 = col index
    x_ref:   (N*Cin, HW)            lane-dense activations (flattened spatial)
    w_ref:   (Cout, KH*KW*Cin)      weights, tap-major (kh, kw, cin) order
    b_ref:   (Cout, 1)              bias
    o_ref:   (N, Cout, HW)          lane-dense output
    p_ref:   (KH*KW*Cin, N*HW)      im2col patch scratch (VMEM)
    """
    xf = x_ref[...]                                     # (N*Cin, HW)

    oh = pos_ref[0:1, :]                                # (1, HW)
    ow = pos_ref[1:2, :]
    row_lo = oh == 0
    row_hi = oh == h - 1
    col_lo = ow == 0
    col_hi = ow == w - 1

    # Pre-compute the (2*pad+1)^2 lane-rolled copies of the flat image once.
    # shifted[(dy, dx)][o] == xf[o + dy*W + dx]  (circular; border lanes are
    # never selected below, so the wrap-around values are harmless).
    shifted = {}
    for dy in range(-pad, pad + 1):
        for dx in range(-pad, pad + 1):
            d = dy * w + dx
            shifted[(dy, dx)] = xf if d == 0 else pltpu.roll(xf, (-d) % hw, axis=1)

    # im2col: reflection handled with masked selects (for pad<=1 the reflected
    # index is exactly the opposite-sign shift), written straight into P —
    # no padded copy, no per-tap reshape, no concatenate.
    for kh in range(kh_size):
        for kw in range(kw_size):
            dy, dx = kh - pad, kw - pad
            v = shifted[(dy, dx)]
            if dx != 0:
                cmask = col_lo if dx < 0 else col_hi
                v = jnp.where(cmask, shifted[(dy, -dx)], v)
            if dy != 0:
                rmask = row_lo if dy < 0 else row_hi
                vr = shifted[(-dy, dx)]
                if dx != 0:
                    vr = jnp.where(cmask, shifted[(-dy, -dx)], vr)
                v = jnp.where(rmask, vr, v)
            t = kh * kw_size + kw
            for b in range(n):
                p_ref[t * c_in:(t + 1) * c_in, b * hw:(b + 1) * hw] = (
                    v[b * c_in:(b + 1) * c_in, :])

    # Single lane-dense MXU matmul over the whole batch + fused bias.
    acc = jnp.dot(w_ref[...], p_ref[...],
                  preferred_element_type=jnp.float32)   # (Cout, N*HW)
    acc = acc + b_ref[...].astype(jnp.float32)
    for b in range(n):                                  # 128-aligned lane slices
        o_ref[b] = acc[:, b * hw:(b + 1) * hw].astype(o_ref.dtype)


def conv_norm_forward(x_nchw, weight_oihw, bias, *, stride=1, norm=False):
    """Pallas implementation of ConvNorm.forward (norm=False path).

    x_nchw:      (N, Cin, H, W)
    weight_oihw: (Cout, Cin, KH, KW)   square kernel, as in the module
    bias:        (Cout,)
    Returns NCHW output, matching the PyTorch module.
    """
    # TODO(synk): norm='IN' / norm='BN' branches not implemented (module default
    # is norm=False); only reflection-pad + conv + bias is exercised here.
    assert norm is False

    n, c_in, h, w = x_nchw.shape
    c_out, c_in_w, kh_size, kw_size = weight_oihw.shape
    assert c_in == c_in_w
    assert kh_size == kw_size, "module uses a square kernel"
    pad = kh_size // 2                      # ReflectionPad2d(kernel_size // 2)

    # TODO(synk): stride > 1 (decimation via BlockSpec/index_map) and
    # kernel_size >= 5 (multi-row reflection) paths not implemented.
    assert stride == 1, "TODO(synk): stride > 1 not implemented in this kernel"
    assert kh_size % 2 == 1 and pad <= 1, \
        "TODO(synk): only kernel_size in {1, 3} implemented in this kernel"
    assert pad < h and pad < w, "reflection padding requires pad < spatial dims"

    h_out, w_out = h, w                     # odd kernel, pad=k//2, stride=1
    hw = h * w
    k_dim = kh_size * kw_size * c_in

    # Lane-dense activations: free minor-dim merge, no transpose, no jnp.pad.
    x_flat = x_nchw.reshape(n * c_in, hw)

    # Weights (O, I, KH, KW) -> (O, KH*KW*I): tap-major order matching the
    # kernel's im2col row order (kh, kw, cin). Tiny tensor; reshaped once.
    w2d = jnp.transpose(weight_oihw, (0, 2, 3, 1)).reshape(c_out, k_dim)
    b2d = bias.reshape(c_out, 1)

    # Static per-lane (output-row, output-col) indices for the boundary masks.
    oh_idx = np.repeat(np.arange(h, dtype=np.int32), w)
    ow_idx = np.tile(np.arange(w, dtype=np.int32), h)
    pos = jnp.asarray(np.stack([oh_idx, ow_idx]))       # (2, HW) int32

    kernel = functools.partial(
        _conv_kernel, n=n, c_in=c_in, c_out=c_out, h=h, w=w,
        kh_size=kh_size, kw_size=kw_size, pad=pad, hw=hw)

    out_flat = pl.pallas_call(
        kernel,
        out_shape=jax.ShapeDtypeStruct((n, c_out, hw), x_nchw.dtype),
        grid_spec=pltpu.PrefetchScalarGridSpec(
            num_scalar_prefetch=0,
            grid=(1,),                                   # whole (tiny) batch in one step
            in_specs=[
                pl.BlockSpec((2, hw), lambda i: (0, 0)),
                pl.BlockSpec((n * c_in, hw), lambda i: (0, 0)),
                pl.BlockSpec((c_out, k_dim), lambda i: (0, 0)),
                pl.BlockSpec((c_out, 1), lambda i: (0, 0)),
            ],
            out_specs=pl.BlockSpec((n, c_out, hw), lambda i: (0, 0, 0)),
            scratch_shapes=[pltpu.VMEM((k_dim, n * hw), x_nchw.dtype)],
        ),
        compiler_params=pltpu.CompilerParams(
            dimension_semantics=("arbitrary",)),
    )(pos, x_flat, w2d, b2d)

    # Pure minor-dim split: no data movement, already NCHW-ordered.
    return out_flat.reshape(n, c_out, h_out, w_out)


def _reference_conv_norm(x_nchw, weight_oihw, bias, *, stride=1):
    """Pure-JAX reference (reflection pad + conv2d + bias) for validation."""
    pad = weight_oihw.shape[2] // 2
    x_pad = jnp.pad(x_nchw, ((0, 0), (0, 0), (pad, pad), (pad, pad)),
                    mode="reflect")
    out = jax.lax.conv_general_dilated(
        x_pad, weight_oihw, window_strides=(stride, stride), padding="VALID",
        dimension_numbers=("NCHW", "OIHW", "NCHW"))
    return out + bias.reshape(1, -1, 1, 1)


if __name__ == "__main__":
    # Module config: ConvNorm(in_feat=4, out_feat=8, kernel_size=3, stride=1)
    in_feat, out_feat, kernel_size, stride = 4, 8, 3, 1
    batch, height, width = 2, 16, 16

    key = jax.random.PRNGKey(0)
    kx, kw, kb = jax.random.split(key, 3)

    x = jax.random.normal(kx, (batch, in_feat, height, width), jnp.float32)
    # Deterministic, PyTorch-shaped Conv2d parameters (OIHW weight + bias).
    fan_in = in_feat * kernel_size * kernel_size
    bound = 1.0 / (fan_in ** 0.5)
    weight = jax.random.uniform(
        kw, (out_feat, in_feat, kernel_size, kernel_size), jnp.float32,
        minval=-bound, maxval=bound)
    bias = jax.random.uniform(kb, (out_feat,), jnp.float32,
                              minval=-bound, maxval=bound)

    out = conv_norm_forward(x, weight, bias, stride=stride, norm=False)
    out = jax.block_until_ready(out)

    ref = jax.block_until_ready(
        _reference_conv_norm(x, weight, bias, stride=stride))
    assert out.shape == (batch, out_feat, height, width)
    assert jnp.allclose(out, ref, atol=1e-5, rtol=1e-5)

    print("KERNEL_OK")
</pallas_src>

<mosaic_0001>
module attributes {stable_mosaic.version = 11 : i64} {
  func.func @_conv_kernel(%arg0: i32, %arg1: memref<2x256xi32, #tpu.memory_space<vmem>>, %arg2: memref<8x256xf32, #tpu.memory_space<vmem>>, %arg3: memref<8x36xf32, #tpu.memory_space<vmem>>, %arg4: memref<8x1xf32, #tpu.memory_space<vmem>>, %arg5: memref<2x8x256xf32, #tpu.memory_space<vmem>>, %arg6: memref<36x512xf32, #tpu.memory_space<vmem>>) attributes {dimension_semantics = [#tpu.dimension_semantics<arbitrary>], iteration_bounds = array<i64: 1>, scalar_prefetch = 0 : i64, scratch_operands = 1 : i64, tpu.core_type = #tpu.core_type<tc>, window_params = [{pipeline_mode = #tpu.pipeline_mode<synchronous>, transform_indices = @transform_0, window_bounds = array<i64: 2, 256>}, {pipeline_mode = #tpu.pipeline_mode<synchronous>, transform_indices = @transform_1, window_bounds = array<i64: 8, 256>}, {pipeline_mode = #tpu.pipeline_mode<synchronous>, transform_indices = @transform_2, window_bounds = array<i64: 8, 36>}, {pipeline_mode = #tpu.pipeline_mode<synchronous>, transform_indices = @transform_3, window_bounds = array<i64: 8, 1>}, {pipeline_mode = #tpu.pipeline_mode<synchronous>, transform_indices = @transform_4, window_bounds = array<i64: 2, 8, 256>}]} {
    %c0 = arith.constant 0 : index
    %c0_0 = arith.constant 0 : index
    %0 = vector.load %arg2[%c0, %c0_0] : memref<8x256xf32, #tpu.memory_space<vmem>>, vector<8x256xf32>
    %c0_1 = arith.constant 0 : index
    %c0_2 = arith.constant 0 : index
    %1 = vector.load %arg1[%c0_1, %c0_2] : memref<2x256xi32, #tpu.memory_space<vmem>>, vector<1x256xi32>
    %c1 = arith.constant 1 : index
    %c0_3 = arith.constant 0 : index
    %2 = vector.load %arg1[%c1, %c0_3] : memref<2x256xi32, #tpu.memory_space<vmem>>, vector<1x256xi32>
    %c0_i32 = arith.constant 0 : i32
    %3 = vector.broadcast %c0_i32 : i32 to vector<1x256xi32>
    %4 = arith.cmpi eq, %1, %3 : vector<1x256xi32>
    %c15_i32 = arith.constant 15 : i32
    %5 = vector.broadcast %c15_i32 : i32 to vector<1x256xi32>
    %6 = arith.cmpi eq, %1, %5 : vector<1x256xi32>
    %c0_i32_4 = arith.constant 0 : i32
    %7 = vector.broadcast %c0_i32_4 : i32 to vector<1x256xi32>
    %8 = arith.cmpi eq, %2, %7 : vector<1x256xi32>
    %c15_i32_5 = arith.constant 15 : i32
    %9 = vector.broadcast %c15_i32_5 : i32 to vector<1x256xi32>
    %10 = arith.cmpi eq, %2, %9 : vector<1x256xi32>
    %c17_i32 = arith.constant 17 : i32
    %11 = tpu.dynamic_rotate %0 by %c17_i32 dim 1 : vector<8x256xf32>, i32 -> vector<8x256xf32>
    %c16_i32 = arith.constant 16 : i32
    %12 = tpu.dynamic_rotate %0 by %c16_i32 dim 1 : vector<8x256xf32>, i32 -> vector<8x256xf32>
    %c15_i32_6 = arith.constant 15 : i32
    %13 = tpu.dynamic_rotate %0 by %c15_i32_6 dim 1 : vector<8x256xf32>, i32 -> vector<8x256xf32>
    %c1_i32 = arith.constant 1 : i32
    %14 = tpu.dynamic_rotate %0 by %c1_i32 dim 1 : vector<8x256xf32>, i32 -> vector<8x256xf32>
    %c255_i32 = arith.constant 255 : i32
    %15 = tpu.dynamic_rotate %0 by %c255_i32 dim 1 : vector<8x256xf32>, i32 -> vector<8x256xf32>
    %c241_i32 = arith.constant 241 : i32
    %16 = tpu.dynamic_rotate %0 by %c241_i32 dim 1 : vector<8x256xf32>, i32 -> vector<8x256xf32>
    %c240_i32 = arith.constant 240 : i32
    %17 = tpu.dynamic_rotate %0 by %c240_i32 dim 1 : vector<8x256xf32>, i32 -> vector<8x256xf32>
    %c239_i32 = arith.constant 239 : i32
    %18 = tpu.dynamic_rotate %0 by %c239_i32 dim 1 : vector<8x256xf32>, i32 -> vector<8x256xf32>
    %19 = vector.shape_cast %8 : vector<1x256xi1> to vector<1x256xi1>
    %20 = vector.broadcast %19 : vector<1x256xi1> to vector<8x256xi1>
    %21 = arith.select %20, %13, %11 : vector<8x256xi1>, vector<8x256xf32>
    %22 = vector.shape_cast %8 : vector<1x256xi1> to vector<1x256xi1>
    %23 = vector.broadcast %22 : vector<1x256xi1> to vector<8x256xi1>
    %24 = arith.select %23, %18, %16 : vector<8x256xi1>, vector<8x256xf32>
    %25 = vector.shape_cast %4 : vector<1x256xi1> to vector<1x256xi1>
    %26 = vector.broadcast %25 : vector<1x256xi1> to vector<8x256xi1>
    %27 = arith.select %26, %24, %21 : vector<8x256xi1>, vector<8x256xf32>
    %28 = vector.extract_strided_slice %27 {offsets = [0, 0], sizes = [4, 256], strides = [1, 1]} : vector<8x256xf32> to vector<4x256xf32>
    %c0_7 = arith.constant 0 : index
    %c0_8 = arith.constant 0 : index
    %29 = vector.load %arg6[%c0_7, %c0_8] : memref<36x512xf32, #tpu.memory_space<vmem>>, vector<4x256xf32>
    tpu.vector_store %arg6[%c0_7, %c0_8], %28 {strides = array<i32>} : memref<36x512xf32, #tpu.memory_space<vmem>>, vector<4x256xf32>,
    %30 = vector.extract_strided_slice %27 {offsets = [4, 0], sizes = [4, 256], strides = [1, 1]} : vector<8x256xf32> to vector<4x256xf32>
    %c0_9 = arith.constant 0 : index
    %c256 = arith.constant 256 : index
    %31 = vector.load %arg6[%c0_9, %c256] : memref<36x512xf32, #tpu.memory_space<vmem>>, vector<4x256xf32>
    tpu.vector_store %arg6[%c0_9, %c256], %30 {strides = array<i32>} : memref<36x512xf32, #tpu.memory_space<vmem>>, vector<4x256xf32>,
    %32 = vector.shape_cast %4 : vector<1x256xi1> to vector<1x256xi1>
    %33 = vector.broadcast %32 : vector<1x256xi1> to vector<8x256xi1>
    %34 = arith.select %33, %17, %12 : vector<8x256xi1>, vector<8x256xf32>
    %35 = vector.extract_strided_slice %34 {offsets = [0, 0], sizes = [4, 256], strides = [1, 1]} : vector<8x256xf32> to vector<4x256xf32>
    %c4 = arith.constant 4 : index
    %c0_10 = arith.constant 0 : index
    %36 = vector.load %arg6[%c4, %c0_10] : memref<36x512xf32, #tpu.memory_space<vmem>>, vector<4x256xf32>
    tpu.vector_store %arg6[%c4, %c0_10], %35 {strides = array<i32>} : memref<36x512xf32, #tpu.memory_space<vmem>>, vector<4x256xf32>,
    %37 = vector.extract_strided_slice %34 {offsets = [4, 0], sizes = [4, 256], strides = [1, 1]} : vector<8x256xf32> to vector<4x256xf32>
    %c4_11 = arith.constant 4 : index
    %c256_12 = arith.constant 256 : index
    %38 = vector.load %arg6[%c4_11, %c256_12] : memref<36x512xf32, #tpu.memory_space<vmem>>, vector<4x256xf32>
    tpu.vector_store %arg6[%c4_11, %c256_12], %37 {strides = array<i32>} : memref<36x512xf32, #tpu.memory_space<vmem>>, vector<4x256xf32>,
    %39 = vector.shape_cast %10 : vector<1x256xi1> to vector<1x256xi1>
    %40 = vector.broadcast %39 : vector<1x256xi1> to vector<8x256xi1>
    %41 = arith.select %40, %11, %13 : vector<8x256xi1>, vector<8x256xf32>
    %42 = vector.shape_cast %10 : vector<1x256xi1> to vector<1x256xi1>
    %43 = vector.broadcast %42 : vector<1x256xi1> to vector<8x256xi1>
    %44 = arith.select %43, %16, %18 : vector<8x256xi1>, vector<8x256xf32>
    %45 = vector.shape_cast %4 : vector<1x256xi1> to vector<1x256xi1>
    %46 = vector.broadcast %45 : vector<1x256xi1> to vector<8x256xi1>
    %47 = arith.select %46, %44, %41 : vector<8x256xi1>, vector<8x256xf32>
    %48 = vector.extract_strided_slice %47 {offsets = [0, 0], sizes = [4, 256], strides = [1, 1]} : vector<8x256xf32> to vector<4x256xf32>
    %c8 = arith.constant 8 : index
    %c0_13 = arith.constant 0 : index
    %49 = vector.load %arg6[%c8, %c0_13] : memref<36x512xf32, #tpu.memory_space<vmem>>, vector<4x256xf32>
    tpu.vector_store %arg6[%c8, %c0_13], %48 {strides = array<i32>} : memref<36x512xf32, #tpu.memory_space<vmem>>, vector<4x256xf32>,
    %50 = vector.extract_strided_slice %47 {offsets = [4, 0], sizes = [4, 256], strides = [1, 1]} : vector<8x256xf32> to vector<4x256xf32>
    %c8_14 = arith.constant 8 : index
    %c256_15 = arith.constant 256 : index
    %51 = vector.load %arg6[%c8_14, %c256_15] : memref<36x512xf32, #tpu.memory_space<vmem>>, vector<4x256xf32>
    tpu.vector_store %arg6[%c8_14, %c256_15], %50 {strides = array<i32>} : memref<36x512xf32, #tpu.memory_space<vmem>>, vector<4x256xf32>,
    %52 = vector.shape_cast %8 : vector<1x256xi1> to vector<1x256xi1>
    %53 = vector.broadcast %52 : vector<1x256xi1> to vector<8x256xi1>
    %54 = arith.select %53, %15, %14 : vector<8x256xi1>, vector<8x256xf32>
    %55 = vector.extract_strided_slice %54 {offsets = [0, 0], sizes = [4, 256], strides = [1, 1]} : vector<8x256xf32> to vector<4x256xf32>
    %c12 = arith.constant 12 : index
    %c0_16 = arith.constant 0 : index
    %56 = vector.load %arg6[%c12, %c0_16] : memref<36x512xf32, #tpu.memory_space<vmem>>, vector<4x256xf32>
    tpu.vector_store %arg6[%c12, %c0_16], %55 {strides = array<i32>} : memref<36x512xf32, #tpu.memory_space<vmem>>, vector<4x256xf32>,
    %57 = vector.extract_strided_slice %54 {offsets = [4, 0], sizes = [4, 256], strides = [1, 1]} : vector<8x256xf32> to vector<4x256xf32>
    %c12_17 = arith.constant 12 : index
    %c256_18 = arith.constant 256 : index
    %58 = vector.load %arg6[%c12_17, %c256_18] : memref<36x512xf32, #tpu.memory_space<vmem>>, vector<4x256xf32>
    tpu.vector_store %arg6[%c12_17, %c256_18], %57 {strides = array<i32>} : memref<36x512xf32, #tpu.memory_space<vmem>>, vector<4x256xf32>,
    %59 = vector.extract_strided_slice %0 {offsets = [0, 0], sizes = [4, 256], strides = [1, 1]} : vector<8x256xf32> to vector<4x256xf32>
    %c16 = arith.constant 16 : index
    %c0_19 = arith.constant 0 : index
    %60 = vector.load %arg6[%c16, %c0_19] : memref<36x512xf32, #tpu.memory_space<vmem>>, vector<4x256xf32>
    tpu.vector_store %arg6[%c16, %c0_19], %59 {strides = array<i32>} : memref<36x512xf32, #tpu.memory_space<vmem>>, vector<4x256xf32>,
    %61 = vector.extract_strided_slice %0 {offsets = [4, 0], sizes = [4, 256], strides = [1, 1]} : vector<8x256xf32> to vector<4x256xf32>
    %c16_20 = arith.constant 16 : index
    %c256_21 = arith.constant 256 : index
    %62 = vector.load %arg6[%c16_20, %c256_21] : memref<36x512xf32, #tpu.memory_space<vmem>>, vector<4x256xf32>
    tpu.vector_store %arg6[%c16_20, %c256_21], %61 {strides = array<i32>} : memref<36x512xf32, #tpu.memory_space<vmem>>, vector<4x256xf32>,
    %63 = vector.shape_cast %10 : vector<1x256xi1> to vector<1x256xi1>
    %64 = vector.broadcast %63 : vector<1x256xi1> to vector<8x256xi1>
    %65 = arith.select %64, %14, %15 : vector<8x256xi1>, vector<8x256xf32>
    %66 = vector.extract_strided_slice %65 {offsets = [0, 0], sizes = [4, 256], strides = [1, 1]} : vector<8x256xf32> to vector<4x256xf32>
    %c20 = arith.constant 20 : index
    %c0_22 = arith.constant 0 : index
    %67 = vector.load %arg6[%c20, %c0_22] : memref<36x512xf32, #tpu.memory_space<vmem>>, vector<4x256xf32>
    tpu.vector_store %arg6[%c20, %c0_22], %66 {strides = array<i32>} : memref<36x512xf32, #tpu.memory_space<vmem>>, vector<4x256xf32>,
    %68 = vector.extract_strided_slice %65 {offsets = [4, 0], sizes = [4, 256], strides = [1, 1]} : vector<8x256xf32> to vector<4x256xf32>
    %c20_23 = arith.constant 20 : index
    %c256_24 = arith.constant 256 : index
    %69 = vector.load %arg6[%c20_23, %c256_24] : memref<36x512xf32, #tpu.memory_space<vmem>>, vector<4x256xf32>
    tpu.vector_store %arg6[%c20_23, %c256_24], %68 {strides = array<i32>} : memref<36x512xf32, #tpu.memory_space<vmem>>, vector<4x256xf32>,
    %70 = vector.shape_cast %8 : vector<1x256xi1> to vector<1x256xi1>
    %71 = vector.broadcast %70 : vector<1x256xi1> to vector<8x256xi1>
    %72 = arith.select %71, %18, %16 : vector<8x256xi1>, vector<8x256xf32>
    %73 = vector.shape_cast %8 : vector<1x256xi1> to vector<1x256xi1>
    %74 = vector.broadcast %73 : vector<1x256xi1> to vector<8x256xi1>
    %75 = arith.select %74, %13, %11 : vector<8x256xi1>, vector<8x256xf32>
    %76 = vector.shape_cast %6 : vector<1x256xi1> to vector<1x256xi1>
    %77 = vector.broadcast %76 : vector<1x256xi1> to vector<8x256xi1>
    %78 = arith.select %77, %75, %72 : vector<8x256xi1>, vector<8x256xf32>
    %79 = vector.extract_strided_slice %78 {offsets = [0, 0], sizes = [4, 256], strides = [1, 1]} : vector<8x256xf32> to vector<4x256xf32>
    %c24 = arith.constant 24 : index
    %c0_25 = arith.constant 0 : index
    %80 = vector.load %arg6[%c24, %c0_25] : memref<36x512xf32, #tpu.memory_space<vmem>>, vector<4x256xf32>
    tpu.vector_store %arg6[%c24, %c0_25], %79 {strides = array<i32>} : memref<36x512xf32, #tpu.memory_space<vmem>>, vector<4x256xf32>,
    %81 = vector.extract_strided_slice %78 {offsets = [4, 0], sizes = [4, 256], strides = [1, 1]} : vector<8x256xf32> to vector<4x256xf32>
    %c24_26 = arith.constant 24 : index
    %c256_27 = arith.constant 256 : index
    %82 = vector.load %arg6[%c24_26, %c256_27] : memref<36x512xf32, #tpu.memory_space<vmem>>, vector<4x256xf32>
    tpu.vector_store %arg6[%c24_26, %c256_27], %81 {strides = array<i32>} : memref<36x512xf32, #tpu.memory_space<vmem>>, vector<4x256xf32>,
    %83 = vector.shape_cast %6 : vector<1x256xi1> to vector<1x256xi1>
    %84 = vector.broadcast %83 : vector<1x256xi1> to vector<8x256xi1>
    %85 = arith.select %84, %12, %17 : vector<8x256xi1>, vector<8x256xf32>
    %86 = vector.extract_strided_slice %85 {offsets = [0, 0], sizes = [4, 256], strides = [1, 1]} : vector<8x256xf32> to vector<4x256xf32>
    %c28 = arith.constant 28 : index
    %c0_28 = arith.constant 0 : index
    %87 = vector.load %arg6[%c28, %c0_28] : memref<36x512xf32, #tpu.memory_space<vmem>>, vector<4x256xf32>
    tpu.vector_store %arg6[%c28, %c0_28], %86 {strides = array<i32>} : memref<36x512xf32, #tpu.memory_space<vmem>>, vector<4x256xf32>,
    %88 = vector.extract_strided_slice %85 {offsets = [4, 0], sizes = [4, 256], strides = [1, 1]} : vector<8x256xf32> to vector<4x256xf32>
    %c28_29 = arith.constant 28 : index
    %c256_30 = arith.constant 256 : index
    %89 = vector.load %arg6[%c28_29, %c256_30] : memref<36x512xf32, #tpu.memory_space<vmem>>, vector<4x256xf32>
    tpu.vector_store %arg6[%c28_29, %c256_30], %88 {strides = array<i32>} : memref<36x512xf32, #tpu.memory_space<vmem>>, vector<4x256xf32>,
    %90 = vector.shape_cast %10 : vector<1x256xi1> to vector<1x256xi1>
    %91 = vector.broadcast %90 : vector<1x256xi1> to vector<8x256xi1>
    %92 = arith.select %91, %16, %18 : vector<8x256xi1>, vector<8x256xf32>
    %93 = vector.shape_cast %10 : vector<1x256xi1> to vector<1x256xi1>
    %94 = vector.broadcast %93 : vector<1x256xi1> to vector<8x256xi1>
    %95 = arith.select %94, %11, %13 : vector<8x256xi1>, vector<8x256xf32>
    %96 = vector.shape_cast %6 : vector<1x256xi1> to vector<1x256xi1>
    %97 = vector.broadcast %96 : vector<1x256xi1> to vector<8x256xi1>
    %98 = arith.select %97, %95, %92 : vector<8x256xi1>, vector<8x256xf32>
    %99 = vector.extract_strided_slice %98 {offsets = [0, 0], sizes = [4, 256], strides = [1, 1]} : vector<8x256xf32> to vector<4x256xf32>
    %c32 = arith.constant 32 : index
    %c0_31 = arith.constant 0 : index
    %100 = vector.load %arg6[%c32, %c0_31] : memref<36x512xf32, #tpu.memory_space<vmem>>, vector<4x256xf32>
    tpu.vector_store %arg6[%c32, %c0_31], %99 {strides = array<i32>} : memref<36x512xf32, #tpu.memory_space<vmem>>, vector<4x256xf32>,
    %101 = vector.extract_strided_slice %98 {offsets = [4, 0], sizes = [4, 256], strides = [1, 1]} : vector<8x256xf32> to vector<4x256xf32>
    %c32_32 = arith.constant 32 : index
    %c256_33 = arith.constant 256 : index
    %102 = vector.load %arg6[%c32_32, %c256_33] : memref<36x512xf32, #tpu.memory_space<vmem>>, vector<4x256xf32>
    tpu.vector_store %arg6[%c32_32, %c256_33], %101 {strides = array<i32>} : memref<36x512xf32, #tpu.memory_space<vmem>>, vector<4x256xf32>,
    %c0_34 = arith.constant 0 : index
    %c0_35 = arith.constant 0 : index
    %103 = vector.load %arg3[%c0_34, %c0_35] : memref<8x36xf32, #tpu.memory_space<vmem>>, vector<8x36xf32>
    %c0_36 = arith.constant 0 : index
    %c0_37 = arith.constant 0 : index
    %104 = vector.load %arg6[%c0_36, %c0_37] : memref<36x512xf32, #tpu.memory_space<vmem>>, vector<36x512xf32>
    %cst = arith.constant dense<0.000000e+00> : vector<8x512xf32>
    %105 = tpu.matmul %103, %104, %cst {dimension_numbers = #tpu.dot_dimension_numbers<[1], [0], [0], [1], [0, 0, 1, 1], [], []>} : vector<8x36xf32>, vector<36x512xf32>, vector<8x512xf32> -> vector<8x512xf32>
    %c0_38 = arith.constant 0 : index
    %c0_39 = arith.constant 0 : index
    %106 = vector.load %arg4[%c0_38, %c0_39] : memref<8x1xf32, #tpu.memory_space<vmem>>, vector<8x1xf32>
    %107 = vector.broadcast %106 : vector<8x1xf32> to vector<8x512xf32>
    %108 = arith.addf %105, %107 : vector<8x512xf32>
    %109 = vector.extract_strided_slice %108 {offsets = [0, 0], sizes = [8, 256], strides = [1, 1]} : vector<8x512xf32> to vector<8x256xf32>
    %c0_40 = arith.constant 0 : index
    %c0_41 = arith.constant 0 : index
    %c0_42 = arith.constant 0 : index
    %110 = vector.load %arg5[%c0_40, %c0_41, %c0_42] : memref<2x8x256xf32, #tpu.memory_space<vmem>>, vector<1x8x256xf32>
    %111 = vector.shape_cast %110 : vector<1x8x256xf32> to vector<8x256xf32>
    %112 = vector.shape_cast %109 : vector<8x256xf32> to vector<1x8x256xf32>
    tpu.vector_store %arg5[%c0_40, %c0_41, %c0_42], %112 {strides = array<i32>} : memref<2x8x256xf32, #tpu.memory_space<vmem>>, vector<1x8x256xf32>,
    %113 = vector.extract_strided_slice %108 {offsets = [0, 256], sizes = [8, 256], strides = [1, 1]} : vector<8x512xf32> to vector<8x256xf32>
    %c1_43 = arith.constant 1 : index
    %c0_44 = arith.constant 0 : index
    %c0_45 = arith.constant 0 : index
    %114 = vector.load %arg5[%c1_43, %c0_44, %c0_45] : memref<2x8x256xf32, #tpu.memory_space<vmem>>, vector<1x8x256xf32>
    %115 = vector.shape_cast %114 : vector<1x8x256xf32> to vector<8x256xf32>
    %116 = vector.shape_cast %113 : vector<8x256xf32> to vector<1x8x256xf32>
    tpu.vector_store %arg5[%c1_43, %c0_44, %c0_45], %116 {strides = array<i32>} : memref<2x8x256xf32, #tpu.memory_space<vmem>>, vector<1x8x256xf32>,
    return
  }
  func.func @transform_0(%arg0: i32) -> (i32, i32) {
    %c0_i32 = arith.constant 0 : i32
    %c0_i32_0 = arith.constant 0 : i32
    %c0_i32_1 = arith.constant 0 : i32
    return %c0_i32, %c0_i32_0 : i32, i32
  }
  func.func @transform_1(%arg0: i32) -> (i32, i32) {
    %c0_i32 = arith.constant 0 : i32
    %c0_i32_0 = arith.constant 0 : i32
    %c0_i32_1 = arith.constant 0 : i32
    return %c0_i32, %c0_i32_0 : i32, i32
  }
  func.func @transform_2(%arg0: i32) -> (i32, i32) {
    %c0_i32 = arith.constant 0 : i32
    %c0_i32_0 = arith.constant 0 : i32
    %c0_i32_1 = arith.constant 0 : i32
    return %c0_i32, %c0_i32_0 : i32, i32
  }
  func.func @transform_3(%arg0: i32) -> (i32, i32) {
    %c0_i32 = arith.constant 0 : i32
    %c0_i32_0 = arith.constant 0 : i32
    %c0_i32_1 = arith.constant 0 : i32
    return %c0_i32, %c0_i32_0 : i32, i32
  }
  func.func @transform_4(%arg0: i32) -> (i32, i32, i32) {
    %c0_i32 = arith.constant 0 : i32
    %c0_i32_0 = arith.constant 0 : i32
    %c0_i32_1 = arith.constant 0 : i32
    %c0_i32_2 = arith.constant 0 : i32
    return %c0_i32, %c0_i32_0, %c0_i32_1 : i32, i32, i32
  }
}

</mosaic_0001>

<llo_original>
// kernel: tpu_custom_call.1
$region0: #{tpu_custom_call.1}
  #allocation0 [shape = 'u32[]', space=smem, size = 0x4, offset = 0x4, fixed_abs, tag = 'smem constant byte address 0x4 - core index']
  #allocation1 [shape = 'u32[144,128]{1,0:T(1,128)}', space=vmem, size = 0x12000, scoped, tag = 'internal scratch']
  #allocation2 [shape = 'f32[36,512]{1,0:T(8,128)}', space=vmem, size = 0x14000, scoped, tag = 'scratch operand']
  %s0 = inlined_call_operand.vmem [shape: s32[2,256], index: 0, kind: input, shape index: {}]
  %s1 = inlined_call_operand.hbm [shape: f32[8,256], index: 1, kind: input, shape index: {}]
  %s2 = inlined_call_operand.vmem [shape: f32[8,36], index: 2, kind: input, shape index: {}]
  %s3 = inlined_call_operand.vmem [shape: f32[8,1], index: 3, kind: input, shape index: {}]
  %s4 = inlined_call_operand.hbm [shape: f32[2,8,256], index: 4, kind: output, shape index: {}]
  %s5 = sld [smem:[#allocation0]]
  $region30: #{tpu_custom_call.1} parent=0
    _
  %s7 = ssub.s32 1, %s5
  %s8 = scalar_select 0, %s7, %s5
  $region1: #{tpu_custom_call.1} parent=0
    #allocation3 [shape = 'u8[8192]{0}', space=vmem, size = 0x2000, scoped, tag = 'input window, operand 1, single buffered']
    #allocation4 [shape = 's32[1]{0}', space=sflag, size = 0x4, scoped, tag = 'scoped memory for tpu_custom_call.1']
    #allocation5 [shape = 's32[1]{0}', space=sflag, size = 0x4, scoped, tag = 'scoped memory for tpu_custom_call.1']
    #allocation6 [shape = 'u8[16384]{0}', space=vmem, size = 0x4000, scoped, tag = 'output window, operand 0, single buffered']
    %9 = vsyncpa [#allocation4], 0
    %10 = vsyncpa [#allocation5], 0
    // Predicated region
    $region2: #{tpu_custom_call.1} parent=1 // pred_check
      _
    $region3: #{tpu_custom_call.1} parent=1 // pred_check_branch
      %12 = sbr.rel (0) target = $region5
    $region4: #{tpu_custom_call.1} parent=1 // pred_region
      _
    $region5: #{tpu_custom_call.1} parent=1 // pred_fallthru
      _
    // Predicated region
    $region6: #{tpu_custom_call.1} parent=1 // pred_check
      _
    $region7: #{tpu_custom_call.1} parent=1 // pred_check_branch
      %14 = sbr.rel (0) target = $region9
    $region8: #{tpu_custom_call.1} parent=1 // pred_region
      %s16 = ssub.s32 256, 256
      %17 = vsyncadd [#allocation4], %s16
      %s19 = sshll.u32 [#allocation3], 4
      %s20 = int_to_ptr.vmem [resolvable:$true] %s19
      %22 = dma.hbm_to_vmem [thread:$0]  %s1, 256, %s20, [#allocation4]
    $region9: #{tpu_custom_call.1} parent=1 // pred_fallthru
      _
    // Predicated region
    $region10: #{tpu_custom_call.1} parent=1 // pred_check
      _
    $region11: #{tpu_custom_call.1} parent=1 // pred_check_branch
      %24 = sbr.rel (0) target = $region13
    $region12: #{tpu_custom_call.1} parent=1 // pred_region
      _
    $region13: #{tpu_custom_call.1} parent=1 // pred_fallthru
      _
    // Predicated region
    $region14: #{tpu_custom_call.1} parent=1 // pred_check
      _
    $region15: #{tpu_custom_call.1} parent=1 // pred_check_branch
      %26 = sbr.rel (0) target = $region17
    $region16: #{tpu_custom_call.1} parent=1 // pred_region
      _
    $region17: #{tpu_custom_call.1} parent=1 // pred_fallthru
      _
    // Predicated region
    $region18: #{tpu_custom_call.1} parent=1 // pred_check
      _
    $region19: #{tpu_custom_call.1} parent=1 // pred_check_branch
      %28 = sbr.rel (0) target = $region21
    $region20: #{tpu_custom_call.1} parent=1 // pred_region
      %29 = dma.done [#allocation4], 256
    $region21: #{tpu_custom_call.1} parent=1 // pred_fallthru
      _
    %v30 = vld [vmem:[#allocation3] sm:$0xff]
    %v31 = vld [vmem:[#allocation3 + $0x8] sm:$0xff]
    %v32 = vld [vmem:[%s0] ss:$2 sm:$0x3]
    %s33 = scalar_lea.vmem %s0, 1
    %v34 = vld [vmem:[%s33] ss:$2 sm:$0x3]
    %vm35 = vcmp.eq.s32.totalorder %v32, 0
    %vm36 = vcmp.eq.s32.totalorder %v32, 15
    %vm37 = vcmp.eq.s32.totalorder %v34, 0
    %vm38 = vcmp.eq.s32.totalorder %v34, 15
    %39 = vrot.lane.b32.xlu0 %v30, 17
    %v40 = vpop.permute.xlu0 %39
    %41 = vrot.lane.b32.xlu0 %v31, 17
    %v42 = vpop.permute.xlu0 %41
    %v43 = vlaneseq
    %v44 = vand.u32 %v43, 127
    %vm45 = vcmp.lt.s32.totalorder %v44, 17
    %v46 = vsel %vm45, %v40, %v42
    %v47 = vsel %vm45, %v42, %v40
    %48 = vrot.lane.b32.xlu0 %v30, 16
    %v49 = vpop.permute.xlu0 %48
    %50 = vrot.lane.b32.xlu0 %v31, 16
    %v51 = vpop.permute.xlu0 %50
    %vm52 = vcmp.lt.s32.totalorder %v44, 16
    %v53 = vsel %vm52, %v49, %v51
    %v54 = vsel %vm52, %v51, %v49
    %55 = vrot.lane.b32.xlu0 %v30, 15
    %v56 = vpop.permute.xlu0 %55
    %57 = vrot.lane.b32.xlu0 %v31, 15
    %v58 = vpop.permute.xlu0 %57
    %vm59 = vcmp.lt.s32.totalorder %v44, 15
    %v60 = vsel %vm59, %v56, %v58
    %v61 = vsel %vm59, %v58, %v56
    %62 = vrot.lane.b32.xlu0 %v30, 1
    %v63 = vpop.permute.xlu0 %62
    %64 = vrot.lane.b32.xlu0 %v31, 1
    %v65 = vpop.permute.xlu0 %64
    %vm66 = vcmp.lt.s32.totalorder %v44, 1
    %v67 = vsel %vm66, %v63, %v65
    %v68 = vsel %vm66, %v65, %v63
    %69 = vrot.lane.b32.xlu0 %v30, 127
    %v70 = vpop.permute.xlu0 %69
    %71 = vrot.lane.b32.xlu0 %v31, 127
    %v72 = vpop.permute.xlu0 %71
    %vm73 = vcmp.lt.s32.totalorder %v44, 127
    %v74 = vsel %vm73, %v70, %v72
    %v75 = vsel %vm73, %v72, %v70
    %76 = vrot.lane.b32.xlu0 %v30, 113
    %v77 = vpop.permute.xlu0 %76
    %78 = vrot.lane.b32.xlu0 %v31, 113
    %v79 = vpop.permute.xlu0 %78
    %vm80 = vcmp.lt.s32.totalorder %v44, 113
    %v81 = vsel %vm80, %v77, %v79
    %v82 = vsel %vm80, %v79, %v77
    %83 = vrot.lane.b32.xlu0 %v30, 112
    %v84 = vpop.permute.xlu0 %83
    %85 = vrot.lane.b32.xlu0 %v31, 112
    %v86 = vpop.permute.xlu0 %85
    %vm87 = vcmp.lt.s32.totalorder %v44, 112
    %v88 = vsel %vm87, %v84, %v86
    %v89 = vsel %vm87, %v86, %v84
    %90 = vrot.lane.b32.xlu0 %v30, 111
    %v91 = vpop.permute.xlu0 %90
    %92 = vrot.lane.b32.xlu0 %v31, 111
    %v93 = vpop.permute.xlu0 %92
    %vm94 = vcmp.lt.s32.totalorder %v44, 111
    %v95 = vsel %vm94, %v91, %v93
    %v96 = vsel %vm94, %v93, %v91
    %v97 = vsel %vm37, 1, 0
    %v98 = vlaneseq
    %v99 = vshrl.u32 %v98, 7
    %v100 = vsub.s32 0, %v99
    %v101 = vrot.slane %v97, %v100
    %v102 = vlaneseq
    %v103 = vshrl.u32 %v102, 7
    %v104 = vsub.s32 1, %v103
    %v105 = vrot.slane %v97, %v104
    %vm106 = vcmp.eq.s32.totalorder %v101, 1
    %vm107 = vcmp.eq.s32.totalorder %v105, 1
    %v108 = vsel %vm106, %v61, %v47
    %v109 = vsel %vm107, %v60, %v46
    %v110 = vsel %vm106, %v95, %v81
    %v111 = vsel %vm107, %v96, %v82
    %v112 = vsel %vm35, 1, 0
    %v113 = vlaneseq
    %v114 = vshrl.u32 %v113, 7
    %v115 = vsub.s32 0, %v114
    %v116 = vrot.slane %v112, %v115
    %v117 = vlaneseq
    %v118 = vshrl.u32 %v117, 7
    %v119 = vsub.s32 1, %v118
    %v120 = vrot.slane %v112, %v119
    %vm121 = vcmp.eq.s32.totalorder %v116, 1
    %vm122 = vcmp.eq.s32.totalorder %v120, 1
    %v123 = vsel %vm121, %v110, %v108
    %v124 = vsel %vm122, %v111, %v109
    %125 = vst [vmem:[#allocation2] sm:$0xf] %v123
    %126 = vst [vmem:[#allocation2 + $0x8] sm:$0xf] %v124
    %v129 = vrot.slane %v123, 4
    %v130 = vrot.slane %v124, 4
    %133 = vst [vmem:[#allocation2 + $0x10] sm:$0xf] %v129
    %134 = vst [vmem:[#allocation2 + $0x18] sm:$0xf] %v130
    %v135 = vsel %vm121, %v88, %v54
    %v136 = vsel %vm122, %v89, %v53
    %v139 = vrot.slane %v135, 4
    %v140 = vrot.slane %v136, 4
    %143 = vst [vmem:[#allocation2] sm:$0xf0] %v139
    %144 = vst [vmem:[#allocation2 + $0x8] sm:$0xf0] %v140
    %145 = vst [vmem:[#allocation2 + $0x10] sm:$0xf0] %v135
    %146 = vst [vmem:[#allocation2 + $0x18] sm:$0xf0] %v136
    %v147 = vsel %vm38, 1, 0
    %v148 = vlaneseq
    %v149 = vshrl.u32 %v148, 7
    %v150 = vsub.s32 0, %v149
    %v151 = vrot.slane %v147, %v150
    %v152 = vlaneseq
    %v153 = vshrl.u32 %v152, 7
    %v154 = vsub.s32 1, %v153
    %v155 = vrot.slane %v147, %v154
    %vm156 = vcmp.eq.s32.totalorder %v151, 1
    %vm157 = vcmp.eq.s32.totalorder %v155, 1
    %v158 = vsel %vm156, %v47, %v61
    %v159 = vsel %vm157, %v46, %v60
    %v160 = vsel %vm156, %v81, %v95
    %v161 = vsel %vm157, %v82, %v96
    %v162 = vsel %vm121, %v160, %v158
    %v163 = vsel %vm122, %v161, %v159
    %164 = vst [vmem:[#allocation2 + $0x20] sm:$0xf] %v162
    %165 = vst [vmem:[#allocation2 + $0x28] sm:$0xf] %v163
    %v168 = vrot.slane %v162, 4
    %v169 = vrot.slane %v163, 4
    %172 = vst [vmem:[#allocation2 + $0x30] sm:$0xf] %v168
    %173 = vst [vmem:[#allocation2 + $0x38] sm:$0xf] %v169
    %v174 = vsel %vm106, %v74, %v68
    %v175 = vsel %vm107, %v75, %v67
    %v178 = vrot.slane %v174, 4
    %v179 = vrot.slane %v175, 4
    %182 = vst [vmem:[#allocation2 + $0x20] sm:$0xf0] %v178
    %183 = vst [vmem:[#allocation2 + $0x28] sm:$0xf0] %v179
    %184 = vst [vmem:[#allocation2 + $0x30] sm:$0xf0] %v174
    %185 = vst [vmem:[#allocation2 + $0x38] sm:$0xf0] %v175
    %186 = vst [vmem:[#allocation2 + $0x40] sm:$0xf] %v30
    %187 = vst [vmem:[#allocation2 + $0x48] sm:$0xf] %v31
    %v190 = vrot.slane %v30, 4
    %v191 = vrot.slane %v31, 4
    %194 = vst [vmem:[#allocation2 + $0x50] sm:$0xf] %v190
    %195 = vst [vmem:[#allocation2 + $0x58] sm:$0xf] %v191
    %v196 = vsel %vm156, %v68, %v74
    %v197 = vsel %vm157, %v67, %v75
    %v200 = vrot.slane %v196, 4
    %v201 = vrot.slane %v197, 4
    %204 = vst [vmem:[#allocation2 + $0x40] sm:$0xf0] %v200
    %205 = vst [vmem:[#allocation2 + $0x48] sm:$0xf0] %v201
    %206 = vst [vmem:[#allocation2 + $0x50] sm:$0xf0] %v196
    %207 = vst [vmem:[#allocation2 + $0x58] sm:$0xf0] %v197
    %v208 = vsel %vm36, 1, 0
    %v209 = vlaneseq
    %v210 = vshrl.u32 %v209, 7
    %v211 = vsub.s32 0, %v210
    %v212 = vrot.slane %v208, %v211
    %v213 = vlaneseq
    %v214 = vshrl.u32 %v213, 7
    %v215 = vsub.s32 1, %v214
    %v216 = vrot.slane %v208, %v215
    %vm217 = vcmp.eq.s32.totalorder %v212, 1
    %vm218 = vcmp.eq.s32.totalorder %v216, 1
    %v219 = vsel %vm217, %v108, %v110
    %v220 = vsel %vm218, %v109, %v111
    %221 = vst [vmem:[#allocation2 + $0x60] sm:$0xf] %v219
    %222 = vst [vmem:[#allocation2 + $0x68] sm:$0xf] %v220
    %v225 = vrot.slane %v219, 4
    %v226 = vrot.slane %v220, 4
    %229 = vst [vmem:[#allocation2 + $0x70] sm:$0xf] %v225
    %230 = vst [vmem:[#allocation2 + $0x78] sm:$0xf] %v226
    %v231 = vsel %vm217, %v54, %v88
    %v232 = vsel %vm218, %v53, %v89
    %v235 = vrot.slane %v231, 4
    %v236 = vrot.slane %v232, 4
    %239 = vst [vmem:[#allocation2 + $0x60] sm:$0xf0] %v235
    %240 = vst [vmem:[#allocation2 + $0x68] sm:$0xf0] %v236
    %241 = vst [vmem:[#allocation2 + $0x70] sm:$0xf0] %v231
    %242 = vst [vmem:[#allocation2 + $0x78] sm:$0xf0] %v232
    %v243 = vsel %vm217, %v158, %v160
    %v244 = vsel %vm218, %v159, %v161
    %245 = vst [vmem:[#allocation2 + $0x80] sm:$0xf] %v243
    %246 = vst [vmem:[#allocation2 + $0x88] sm:$0xf] %v244
    %v249 = vrot.slane %v243, 4
    %v250 = vrot.slane %v244, 4
    %253 = vst [vmem:[#allocation2 + $0x90] sm:$0xf] %v249
    %254 = vst [vmem:[#allocation2 + $0x98] sm:$0xf] %v250
    %v255 = vld [vmem:[%s2] sm:$0xff]
    %v256 = vld [vmem:[#allocation2] sm:$0xff]
    %v257 = vld [vmem:[#allocation2 + $0x8] sm:$0xff]
    %v258 = vld [vmem:[#allocation2 + $0x10] sm:$0xff]
    %v259 = vld [vmem:[#allocation2 + $0x18] sm:$0xff]
    %v260 = vld [vmem:[#allocation2 + $0x20] sm:$0xff]
    %v261 = vld [vmem:[#allocation2 + $0x28] sm:$0xff]
    %v262 = vld [vmem:[#allocation2 + $0x30] sm:$0xff]
    %v263 = vld [vmem:[#allocation2 + $0x38] sm:$0xff]
    %v264 = vld [vmem:[#allocation2 + $0x40] sm:$0xff]
    %v265 = vld [vmem:[#allocation2 + $0x48] sm:$0xff]
    %v266 = vld [vmem:[#allocation2 + $0x50] sm:$0xff]
    %v267 = vld [vmem:[#allocation2 + $0x58] sm:$0xff]
    %v268 = vld [vmem:[#allocation2 + $0x60] sm:$0xff]
    %v269 = vld [vmem:[#allocation2 + $0x68] sm:$0xff]
    %v270 = vld [vmem:[#allocation2 + $0x70] sm:$0xff]
    %v271 = vld [vmem:[#allocation2 + $0x78] sm:$0xff]
    %v272 = vld [vmem:[#allocation2 + $0x80] sm:$0xf]
    %v273 = vld [vmem:[#allocation2 + $0x88] sm:$0xf]
    %v274 = vld [vmem:[#allocation2 + $0x90] sm:$0xf]
    %v275 = vld [vmem:[#allocation2 + $0x98] sm:$0xf]
    %v276 = vld [vmem:[%s3] sm:$0xff]
    %278 = vset.pattern.permute.xlu0 0
    %279 = vperm.xlu0 %278, %v276
    %v280 = vpop.permute.xlu0 %279
    %vm282 = vcmask 293888
    %v284 = vsel %vm282, %v255, 0
    %vm286 = vcmask 1043456
    %v288 = vsel %vm286, %v272, 0
    %v291 = vsel %vm286, %v273, 0
    %v294 = vsel %vm286, %v274, 0
    %v297 = vsel %vm286, %v275, 0
    %299 = vmatprep.subr.mxu0 %v257
    %300 = vmatpush1.msra.mxu0 %v256
    %301 = vmatprep.subr.mxu0 %v261
    %302 = vmatpush1.msra.mxu0 %v260
    %303 = vmatprep.subr.mxu0 %v265
    %304 = vmatpush1.msra.mxu0 %v264
    %305 = vmatprep.subr.mxu0 %v269
    %306 = vmatpush1.msra.mxu0 %v268
    %307 = vmatprep.subr.mxu0 %v291
    %308 = vmatpush1.msra.mxu0 %v288
    %309 = vmatprep.subr.mxu0 0.0
    %310 = vmatpush1.msra.mxu0 0.0
    %311 = vmatprep.subr.mxu0 0.0
    %312 = vmatpush1.msra.mxu0 0.0
    %313 = vmatprep.subr.mxu0 0.0
    %314 = vmatpush1.msra.mxu0 0.0
    %315 = vmatprep.subr.mxu0 0.0
    %316 = vmatpush1.msra.mxu0 0.0
    %317 = vmatprep.subr.mxu0 0.0
    %318 = vmatpush1.msra.mxu0 0.0
    %319 = vmatprep.subr.mxu0 0.0
    %320 = vmatpush1.msra.mxu0 0.0
    %321 = vmatprep.subr.mxu0 0.0
    %322 = vmatpush1.msra.mxu0 0.0
    %323 = vmatprep.subr.mxu0 0.0
    %324 = vmatpush1.msra.mxu0 0.0
    %325 = vmatprep.subr.mxu0 0.0
    %326 = vmatpush1.msra.mxu0 0.0
    %327 = vmatprep.subr.mxu0 0.0
    %328 = vmatpush1.msra.mxu0 0.0
    %329 = vmatprep.subr.mxu0 0.0
    %330 = vmatpush1.msra.mxu0 0.0
    %331 = vmatprep.subr.mxu0 0.0
    %332 = vmatpush1.msra.mxu0 0.0
    %333 = vmatprep.subr.mxu0 0.0
    %334 = vmatpush1.msra.mxu0 0.0
    %335 = vmatprep.subr.mxu0 0.0
    %336 = vmatpush1.msra.mxu0 0.0
    %337 = vmatprep.subr.mxu0 0.0
    %338 = vmatpush1.msra.mxu0 0.0
    %339 = vmatprep.subr.mxu0 0.0
    %340 = vmatpush1.msra.mxu0 0.0
    %341 = vmatprep.subr.mxu0 0.0
    %342 = vmatpush1.msra.mxu0 0.0
    %343 = vmatprep.subr.mxu0 0.0
    %344 = vmatpush1.msra.mxu0 0.0
    %345 = vmatprep.subr.mxu0 0.0
    %346 = vmatpush1.msra.mxu0 0.0
    %347 = vmatprep.subr.mxu0 0.0
    %348 = vmatpush1.msra.mxu0 0.0
    %349 = vmatprep.subr.mxu0 0.0
    %350 = vmatpush1.msra.mxu0 0.0
    %351 = vmatprep.subr.mxu0 0.0
    %352 = vmatpush1.msra.mxu0 0.0
    %353 = vmatprep.subr.mxu0 0.0
    %354 = vmatpush1.msra.mxu0 0.0
    %355 = vmatprep.subr.mxu0 0.0
    %356 = vmatpush1.msra.mxu0 0.0
    %357 = vmatprep.subr.mxu0 0.0
    %358 = vmatpush1.msra.mxu0 0.0
    %359 = vmatprep.subr.mxu0 0.0
    %360 = vmatpush1.msra.mxu0 0.0
    %361 = vmatprep.subr.mxu0 0.0
    %362 = vmatpush1.msra.mxu0 0.0
    %363 = vmatprep.mubr.f32.mxu0 0.0
    %364 = vmatmul.mubr.f32.gmra.mrb[0].mxu0 %v284
    %v365 = vpop.f32.mrb[0].mxu0
    %v366 = vadd.f32 %v280, %v365
    %v367 = vpop.f32.mrb[0].mxu0
    %v368 = vadd.f32 %v280, %v367
    %369 = vdwg.mxu0
    %370 = vmatprep.subr.mxu0 %v259
    %371 = vmatpush1.msra.mxu0 %v258
    %372 = vmatprep.subr.mxu0 %v263
    %373 = vmatpush1.msra.mxu0 %v262
    %374 = vmatprep.subr.mxu0 %v267
    %375 = vmatpush1.msra.mxu0 %v266
    %376 = vmatprep.subr.mxu0 %v271
    %377 = vmatpush1.msra.mxu0 %v270
    %378 = vmatprep.subr.mxu0 %v297
    %379 = vmatpush1.msra.mxu0 %v294
    %380 = vmatprep.subr.mxu0 0.0
    %381 = vmatpush1.msra.mxu0 0.0
    %382 = vmatprep.subr.mxu0 0.0
    %383 = vmatpush1.msra.mxu0 0.0
    %384 = vmatprep.subr.mxu0 0.0
    %385 = vmatpush1.msra.mxu0 0.0
    %386 = vmatprep.subr.mxu0 0.0
    %387 = vmatpush1.msra.mxu0 0.0
    %388 = vmatprep.subr.mxu0 0.0
    %389 = vmatpush1.msra.mxu0 0.0
    %390 = vmatprep.subr.mxu0 0.0
    %391 = vmatpush1.msra.mxu0 0.0
    %392 = vmatprep.subr.mxu0 0.0
    %393 = vmatpush1.msra.mxu0 0.0
    %394 = vmatprep.subr.mxu0 0.0
    %395 = vmatpush1.msra.mxu0 0.0
    %396 = vmatprep.subr.mxu0 0.0
    %397 = vmatpush1.msra.mxu0 0.0
    %398 = vmatprep.subr.mxu0 0.0
    %399 = vmatpush1.msra.mxu0 0.0
    %400 = vmatprep.subr.mxu0 0.0
    %401 = vmatpush1.msra.mxu0 0.0
    %402 = vmatprep.subr.mxu0 0.0
    %403 = vmatpush1.msra.mxu0 0.0
    %404 = vmatprep.subr.mxu0 0.0
    %405 = vmatpush1.msra.mxu0 0.0
    %406 = vmatprep.subr.mxu0 0.0
    %407 = vmatpush1.msra.mxu0 0.0
    %408 = vmatprep.subr.mxu0 0.0
    %409 = vmatpush1.msra.mxu0 0.0
    %410 = vmatprep.subr.mxu0 0.0
    %411 = vmatpush1.msra.mxu0 0.0
    %412 = vmatprep.subr.mxu0 0.0
    %413 = vmatpush1.msra.mxu0 0.0
    %414 = vmatprep.subr.mxu0 0.0
    %415 = vmatpush1.msra.mxu0 0.0
    %416 = vmatprep.subr.mxu0 0.0
    %417 = vmatpush1.msra.mxu0 0.0
    %418 = vmatprep.subr.mxu0 0.0
    %419 = vmatpush1.msra.mxu0 0.0
    %420 = vmatprep.subr.mxu0 0.0
    %421 = vmatpush1.msra.mxu0 0.0
    %422 = vmatprep.subr.mxu0 0.0
    %423 = vmatpush1.msra.mxu0 0.0
    %424 = vmatprep.subr.mxu0 0.0
    %425 = vmatpush1.msra.mxu0 0.0
    %426 = vmatprep.subr.mxu0 0.0
    %427 = vmatpush1.msra.mxu0 0.0
    %428 = vmatprep.subr.mxu0 0.0
    %429 = vmatpush1.msra.mxu0 0.0
    %430 = vmatprep.subr.mxu0 0.0
    %431 = vmatpush1.msra.mxu0 0.0
    %432 = vmatprep.subr.mxu0 0.0
    %433 = vmatpush1.msra.mxu0 0.0
    %434 = vmatprep.mubr.f32.mxu0 0.0
    %435 = vmatmul.mubr.f32.gmra.mrb[0].mxu0 %v284
    %v436 = vpop.f32.mrb[0].mxu0
    %v437 = vadd.f32 %v280, %v436
    %v438 = vpop.f32.mrb[0].mxu0
    %v439 = vadd.f32 %v280, %v438
    %440 = vdwg.mxu0
    %441 = vst [vmem:[#allocation6] sm:$0xff] %v366
    %442 = vst [vmem:[#allocation6 + $0x8] sm:$0xff] %v368
    %s443 = scalar_lea.vmem [#allocation6], 16
    %444 = vst [vmem:[%s443] sm:$0xff] %v437
    %445 = vst [vmem:[%s443 + $0x8] sm:$0xff] %v439
    // Predicated region
    $region22: #{tpu_custom_call.1} parent=1 // pred_check
      _
    $region23: #{tpu_custom_call.1} parent=1 // pred_check_branch
      %447 = sbr.rel (0) target = $region25
    $region24: #{tpu_custom_call.1} parent=1 // pred_region
      %s449 = ssub.s32 512, 512
      %450 = vsyncadd [#allocation5], %s449
      %s451 = sshll.u32 [#allocation6], 4
      %s452 = int_to_ptr.vmem [resolvable:$true] %s451
      %457 = dma.vmem_to_hbm [thread:$0]  %s452, 512, %s4, [#allocation5], 256, 256, 16
    $region25: #{tpu_custom_call.1} parent=1 // pred_fallthru
      _
    // Predicated region
    $region26: #{tpu_custom_call.1} parent=1 // pred_check
      _
    $region27: #{tpu_custom_call.1} parent=1 // pred_check_branch
      %459 = sbr.rel (0) target = $region29
    $region28: #{tpu_custom_call.1} parent=1 // pred_region
      %460 = dma.done [#allocation5], 512
    $region29: #{tpu_custom_call.1} parent=1 // pred_fallthru
      _
    %461 = vsyncpa [#allocation4], 1
    %462 = vsyncpa [#allocation5], 1

</llo_original>
